<compile_context>
chip_gen: v6e
topology: v6e:2x2x1
jax: 0.10.0
libtpu: 0.0.40
codegen_flags: <defaults>
</compile_context>

<pallas_src>
import math
from functools import partial

import jax
import jax.numpy as jnp
from jax.experimental import pallas as pl
from jax.experimental.pallas import tpu as pltpu


def _merge_kernel(x_ref, halo_ref, w_ref, p_ref, o_ref, slab_ref, *, cout):
    """Fused 3x3/stride-2 conv (single K=4*C4 MXU matmul) + bias + LayerNorm.

    x_ref:    (1, TH, Wq, C4)  compute dtype -- TH s2d rows of this tile
    halo_ref: (1, 1,  Wq, C4)  compute dtype -- s2d row just below the tile
    w_ref:    (4*C4, Coutp)    compute dtype -- the 4 taps stacked along K
    p_ref:    (3, Coutp)       float32       -- [conv bias, ln gamma, ln beta]
    o_ref:    (1, M, Coutp)                  -- output rows (row-major h, w)
    slab_ref: (M, 4*C4)        compute dtype -- activation slab (VMEM scratch)
    """
    _, TH, Wq, C4 = x_ref.shape
    Wop = Wq - 1
    M = TH * Wop
    Mh = (TH - 1) * Wop

    # dh = 0 taps (whole tile).  The (TH, Wop, C4) -> (M, C4) collapse is
    # layout preserving because Wop is a multiple of the bf16 sublane tile.
    slab_ref[:, 0:C4] = x_ref[0, :, 0:Wop, :].reshape(M, C4)
    slab_ref[:, C4:2 * C4] = x_ref[0, :, 1:Wq, :].reshape(M, C4)
    # dh = 1 taps: rows 1..TH-1 of the tile ...
    if TH > 1:
        slab_ref[0:Mh, 2 * C4:3 * C4] = x_ref[0, 1:TH, 0:Wop, :].reshape(Mh, C4)
        slab_ref[0:Mh, 3 * C4:4 * C4] = x_ref[0, 1:TH, 1:Wq, :].reshape(Mh, C4)
    # ... plus the halo row below the tile for this tile's last output row.
    slab_ref[Mh:M, 2 * C4:3 * C4] = halo_ref[0, 0, 0:Wop, :]
    slab_ref[Mh:M, 3 * C4:4 * C4] = halo_ref[0, 0, 1:Wq, :]

    # One fused MXU matmul with K = 4*C4 (accumulation inside the MXU).
    y = jnp.dot(slab_ref[...], w_ref[...], preferred_element_type=jnp.float32)
    y = y + p_ref[0:1, :]                                       # conv bias

    # LayerNorm over the true `cout` channels (eps = 1e-5).  Padded channels
    # of y are exactly zero (zero weight columns + zero bias), so the
    # full-width one-pass sums are exact.
    inv_c = 1.0 / cout
    s1 = jnp.sum(y, axis=-1, keepdims=True)
    s2 = jnp.sum(y * y, axis=-1, keepdims=True)
    mean = s1 * inv_c
    var = s2 * inv_c - mean * mean
    inv = jax.lax.rsqrt(var + 1e-5)
    gamma = p_ref[1:2, :]
    beta = p_ref[2:3, :]
    o_ref[0] = ((y - mean) * (inv * gamma) + beta).astype(o_ref.dtype)


def _is_big_vmem_chip():
    """True for 128-MiB-VMEM parts (v4/v5/v6), False for v7x-class / unknown."""
    try:
        kind = jax.devices()[0].device_kind.lower()
        if "v7" in kind:
            return False
        if any(v in kind for v in ("v4", "v5", "v6")):
            return True
    except Exception:
        pass
    try:
        return int(pltpu.get_tpu_info().vmem_capacity_bytes) >= 100 * 1024 * 1024
    except Exception:
        return False


def _choose_tile(ho, wop, c4, k4, coutp, isz, osz, batch):
    """Pick the row-tile height TH and the VMEM limit (generation aware)."""
    if _is_big_vmem_chip():                 # v4/v5/v6: 128 MiB physical VMEM
        budget, vmem_limit = 48 << 20, 96 << 20
        row_target, min_steps = 4096, 2
    else:                                   # v7x: 64 MiB per TensorCore
        budget, vmem_limit = 20 << 20, 48 << 20
        row_target, min_steps = 2048, 4

    wq = wop + 1

    def est(th):
        m = th * wop
        return (2 * th * wq * c4 * isz          # x tile (double buffered)
                + 2 * wq * c4 * isz             # halo row (double buffered)
                + 2 * m * coutp * osz           # output (double buffered)
                + 2 * k4 * coutp * isz          # tap weights
                + m * k4 * isz                  # activation slab (scratch)
                + 2 * m * coutp * 4             # f32 matmul result + LN temp
                + m * c4 * isz)                 # tap staging copy

    th = min(ho, max(1, row_target // wop))
    while th > 1 and est(th) > budget:
        th -= 1
    # Keep enough grid steps so both TensorCores stay busy on 2-TC chips.
    steps_per_batch = -(-min_steps // batch)
    th = min(th, max(1, -(-ho // steps_per_batch)))
    # Round M = TH*Wop down to a 256 (or 128) multiple for the MXU, but only
    # if that does not increase the number of (padded) rows actually computed.
    base_rows = -(-ho // th) * th
    for mult in (256, 128):
        g = mult // math.gcd(wop, mult)
        tha = (th // g) * g
        if tha >= 1 and -(-ho // tha) * tha <= base_rows:
            th = tha
            break
    return th, vmem_limit


@partial(jax.jit, static_argnums=(1, 2, 7))
def _merge_block_impl(x, H, W, conv_w, conv_b, ln_g, ln_b, compute_dtype_name):
    compute_dtype = jnp.dtype(compute_dtype_name)
    B, HW, Cin = x.shape
    assert HW == H * W, (HW, H, W)
    Cout = conv_w.shape[0]
    out_dtype = x.dtype

    Ho = (H + 1) // 2
    Wo = (W + 1) // 2

    # Alignment padding: Wop multiple of 16 (layout-preserving collapses and
    # >=8-aligned output blocks); Cin padded so C4 = 4*Cin_p is a 128
    # multiple (lane-aligned slab groups); Cout padded to a 128 multiple
    # (lane-dense unmasked output stores).
    SUB = 16
    Wop = -(-Wo // SUB) * SUB
    Wq = Wop + 1
    Cin_p = -(-Cin // 32) * 32
    C4 = 4 * Cin_p
    K4 = 4 * C4
    Coutp = -(-Cout // 128) * 128

    isz = jnp.dtype(compute_dtype).itemsize
    osz = jnp.dtype(out_dtype).itemsize
    TH, vmem_limit = _choose_tile(Ho, Wop, C4, K4, Coutp, isz, osz, B)

    n_t = -(-Ho // TH)                  # ceil(Ho / TH)
    Hmax = n_t * TH
    Hq = Hmax + 1
    M = TH * Wop

    # (B, H*W, Cin) is already a flattened NHWC image -> free reshape.  Cast
    # to the compute dtype BEFORE pad / pixel-unshuffle (halves relayout HBM
    # traffic).
    x_nhwc = x.reshape(B, H, W, Cin).astype(compute_dtype)
    pad_b = 2 * Hq - H - 1              # conv zero pad: 1 top, >= 1 bottom
    pad_r = 2 * Wq - W - 1
    xp = jnp.pad(x_nhwc, ((0, 0), (1, pad_b), (1, pad_r), (0, Cin_p - Cin)))

    # Space-to-depth: stride-2 3x3 conv -> stride-1 2x2 conv over C4 channels.
    s2d = xp.reshape(B, Hq, 2, Wq, 2, Cin_p).transpose(0, 1, 3, 2, 4, 5)
    s2d = s2d.reshape(B, Hq, Wq, C4)

    # OIHW weights -> (4*C4, Coutp).  K index = (2*dh+dw)*C4 + (2*ph+pw)*Cin_p
    # + c with (kh, kw) = (2*dh + ph, 2*dw + pw).
    w4 = jnp.zeros((2, 2, 2, 2, Cin_p, Coutp), dtype=jnp.float32)
    for kh in range(3):
        for kw in range(3):
            dh, ph = divmod(kh, 2)
            dw, pw = divmod(kw, 2)
            w4 = w4.at[dh, dw, ph, pw, :Cin, :Cout].set(conv_w[:, :, kh, kw].T)
    wk = w4.reshape(K4, Coutp).astype(compute_dtype)

    params = jnp.zeros((3, Coutp), dtype=jnp.float32)
    params = params.at[0, :Cout].set(conv_b.astype(jnp.float32))
    params = params.at[1, :Cout].set(ln_g.astype(jnp.float32))
    params = params.at[2, :Cout].set(ln_b.astype(jnp.float32))

    cost = pl.CostEstimate(
        flops=2 * B * n_t * M * K4 * Coutp,
        transcendentals=B * n_t * M,
        bytes_accessed=(B * Hq * Wq * C4 * isz + K4 * Coutp * isz
                        + B * n_t * M * Coutp * osz + 3 * Coutp * 4))

    out = pl.pallas_call(
        partial(_merge_kernel, cout=Cout),
        out_shape=jax.ShapeDtypeStruct((B, Hmax * Wop, Coutp), out_dtype),
        grid=(B, n_t),
        in_specs=[
            pl.BlockSpec((1, TH, Wq, C4), lambda b, t: (b, t, 0, 0)),
            pl.BlockSpec((1, 1, Wq, C4), lambda b, t: (b, (t + 1) * TH, 0, 0)),
            pl.BlockSpec((K4, Coutp), lambda b, t: (0, 0)),
            pl.BlockSpec((3, Coutp), lambda b, t: (0, 0)),
        ],
        out_specs=pl.BlockSpec((1, M, Coutp), lambda b, t: (b, t, 0)),
        scratch_shapes=[pltpu.VMEM((M, K4), compute_dtype)],
        compiler_params=pltpu.CompilerParams(
            dimension_semantics=("parallel", "parallel"),
            vmem_limit_bytes=vmem_limit),
        cost_estimate=cost,
    )(s2d, s2d, wk, params)

    # Crop only when padding was actually introduced (saves a full HBM pass).
    if Hmax == Ho and Wop == Wo and Coutp == Cout:
        y = out.reshape(B, Ho * Wo, Cout)
    else:
        y = out.reshape(B, Hmax, Wop, Coutp)[:, :Ho, :Wo, :Cout]
        y = y.reshape(B, Ho * Wo, Cout)
    return y


def merge_block(x, H, W, conv_w, conv_b, ln_g, ln_b,
                compute_dtype=jnp.bfloat16):
    """Merge_Block.forward: x (B, H*W, Cin) -> (y (B, Ho*Wo, Cout), Ho, Wo)."""
    Ho = (H + 1) // 2
    Wo = (W + 1) // 2
    y = _merge_block_impl(x, H, W, conv_w, conv_b, ln_g, ln_b,
                          jnp.dtype(compute_dtype).name)
    return y, Ho, Wo


def merge_block_ref(x, H, W, conv_w, conv_b, ln_g, ln_b):
    """Pure-JAX (f32) reference mirroring the PyTorch forward."""
    B, HW, Cin = x.shape
    x_img = jnp.transpose(x, (0, 2, 1)).reshape(B, Cin, H, W)
    y = jax.lax.conv_general_dilated(
        x_img, conv_w, window_strides=(2, 2), padding=((1, 1), (1, 1)),
        dimension_numbers=("NCHW", "OIHW", "NCHW"))
    y = y + conv_b.reshape(1, -1, 1, 1)
    _, Co, Ho, Wo = y.shape
    y = y.reshape(B, Co, Ho * Wo).transpose(0, 2, 1)
    mean = jnp.mean(y, axis=-1, keepdims=True)
    var = jnp.mean((y - mean) ** 2, axis=-1, keepdims=True)
    y = (y - mean) / jnp.sqrt(var + 1e-5) * ln_g + ln_b
    return y, Ho, Wo


if __name__ == "__main__":
    def _check(B, Cin, Cout, H, W, seed, tol):
        key = jax.random.fold_in(jax.random.PRNGKey(0), seed)
        kx, kw, kb, kg, kb2 = jax.random.split(key, 5)
        x = jax.random.normal(kx, (B, H * W, Cin), dtype=jnp.float32)
        conv_w = 0.1 * jax.random.normal(kw, (Cout, Cin, 3, 3), dtype=jnp.float32)
        conv_b = 0.01 * jax.random.normal(kb, (Cout,), dtype=jnp.float32)
        ln_g = 1.0 + 0.1 * jax.random.normal(kg, (Cout,), dtype=jnp.float32)
        ln_b = 0.1 * jax.random.normal(kb2, (Cout,), dtype=jnp.float32)

        y, Ho, Wo = merge_block(x, H, W, conv_w, conv_b, ln_g, ln_b)
        y = jax.block_until_ready(y)

        y_ref, Ho_r, Wo_r = merge_block_ref(x, H, W, conv_w, conv_b, ln_g, ln_b)
        assert (Ho, Wo) == (Ho_r, Wo_r)
        assert y.shape == (B, Ho * Wo, Cout)
        err = float(jnp.max(jnp.abs(y - y_ref)))
        # bf16 MXU operands -> small deviation vs. the all-f32 reference.
        assert err < tol, f"max err {err} (B={B} Cin={Cin} Cout={Cout} H={H} W={W})"

    # Small smoke test at module-implied sizes.
    _check(B=2, Cin=4, Cout=8, H=16, W=16, seed=0, tol=5e-2)
    # Lane-aligned channel config with odd spatial size (exercises the
    # padding + crop paths and the 128-aligned slab/output layout).
    _check(B=1, Cin=32, Cout=128, H=17, W=17, seed=1, tol=5e-2)

    print("KERNEL_OK")
</pallas_src>

<mosaic_0001>
module attributes {stable_mosaic.version = 11 : i64} {
  func.func @_merge_kernel(%arg0: i32, %arg1: i32, %arg2: memref<1x4x17x128xbf16, #tpu.memory_space<vmem>>, %arg3: memref<1x1x17x128xbf16, #tpu.memory_space<vmem>>, %arg4: memref<512x128xbf16, #tpu.memory_space<vmem>>, %arg5: memref<3x128xf32, #tpu.memory_space<vmem>>, %arg6: memref<1x64x128xf32, #tpu.memory_space<vmem>>, %arg7: memref<64x512xbf16, #tpu.memory_space<vmem>>) attributes {dimension_semantics = [#tpu.dimension_semantics<parallel>, #tpu.dimension_semantics<parallel>], iteration_bounds = array<i64: 2, 2>, scalar_prefetch = 0 : i64, scratch_operands = 1 : i64, tpu.core_type = #tpu.core_type<tc>, window_params = [{transform_indices = @transform_0, window_bounds = array<i64: 1, 4, 17, 128>}, {transform_indices = @transform_1, window_bounds = array<i64: 1, 1, 17, 128>}, {pipeline_mode = #tpu.pipeline_mode<synchronous>, transform_indices = @transform_2, window_bounds = array<i64: 512, 128>}, {pipeline_mode = #tpu.pipeline_mode<synchronous>, transform_indices = @transform_3, window_bounds = array<i64: 3, 128>}, {transform_indices = @transform_4, window_bounds = array<i64: 1, 64, 128>}]} {
    %c0 = arith.constant 0 : index
    %c0_0 = arith.constant 0 : index
    %c0_1 = arith.constant 0 : index
    %c0_2 = arith.constant 0 : index
    %0 = vector.load %arg2[%c0, %c0_0, %c0_1, %c0_2] : memref<1x4x17x128xbf16, #tpu.memory_space<vmem>>, vector<1x4x16x128xbf16>
    %1 = vector.shape_cast %0 : vector<1x4x16x128xbf16> to vector<4x16x128xbf16>
    %2 = vector.shape_cast %1 : vector<4x16x128xbf16> to vector<64x128xbf16>
    %c0_3 = arith.constant 0 : index
    %c0_4 = arith.constant 0 : index
    %3 = vector.load %arg7[%c0_3, %c0_4] : memref<64x512xbf16, #tpu.memory_space<vmem>>, vector<64x128xbf16>
    tpu.vector_store %arg7[%c0_3, %c0_4], %2 {strides = array<i32>} : memref<64x512xbf16, #tpu.memory_space<vmem>>, vector<64x128xbf16>,
    %c0_5 = arith.constant 0 : index
    %c0_6 = arith.constant 0 : index
    %c1 = arith.constant 1 : index
    %c0_7 = arith.constant 0 : index
    %4 = vector.load %arg2[%c0_5, %c0_6, %c1, %c0_7] : memref<1x4x17x128xbf16, #tpu.memory_space<vmem>>, vector<1x4x16x128xbf16>
    %5 = vector.shape_cast %4 : vector<1x4x16x128xbf16> to vector<4x16x128xbf16>
    %6 = vector.shape_cast %5 : vector<4x16x128xbf16> to vector<64x128xbf16>
    %c0_8 = arith.constant 0 : index
    %c128 = arith.constant 128 : index
    %7 = vector.load %arg7[%c0_8, %c128] : memref<64x512xbf16, #tpu.memory_space<vmem>>, vector<64x128xbf16>
    tpu.vector_store %arg7[%c0_8, %c128], %6 {strides = array<i32>} : memref<64x512xbf16, #tpu.memory_space<vmem>>, vector<64x128xbf16>,
    %c0_9 = arith.constant 0 : index
    %c1_10 = arith.constant 1 : index
    %c0_11 = arith.constant 0 : index
    %c0_12 = arith.constant 0 : index
    %8 = vector.load %arg2[%c0_9, %c1_10, %c0_11, %c0_12] : memref<1x4x17x128xbf16, #tpu.memory_space<vmem>>, vector<1x3x16x128xbf16>
    %9 = vector.shape_cast %8 : vector<1x3x16x128xbf16> to vector<3x16x128xbf16>
    %10 = vector.shape_cast %9 : vector<3x16x128xbf16> to vector<48x128xbf16>
    %c0_13 = arith.constant 0 : index
    %c256 = arith.constant 256 : index
    %11 = vector.load %arg7[%c0_13, %c256] : memref<64x512xbf16, #tpu.memory_space<vmem>>, vector<48x128xbf16>
    tpu.vector_store %arg7[%c0_13, %c256], %10 {strides = array<i32>} : memref<64x512xbf16, #tpu.memory_space<vmem>>, vector<48x128xbf16>,
    %c0_14 = arith.constant 0 : index
    %c1_15 = arith.constant 1 : index
    %c1_16 = arith.constant 1 : index
    %c0_17 = arith.constant 0 : index
    %12 = vector.load %arg2[%c0_14, %c1_15, %c1_16, %c0_17] : memref<1x4x17x128xbf16, #tpu.memory_space<vmem>>, vector<1x3x16x128xbf16>
    %13 = vector.shape_cast %12 : vector<1x3x16x128xbf16> to vector<3x16x128xbf16>
    %14 = vector.shape_cast %13 : vector<3x16x128xbf16> to vector<48x128xbf16>
    %c0_18 = arith.constant 0 : index
    %c384 = arith.constant 384 : index
    %15 = vector.load %arg7[%c0_18, %c384] : memref<64x512xbf16, #tpu.memory_space<vmem>>, vector<48x128xbf16>
    tpu.vector_store %arg7[%c0_18, %c384], %14 {strides = array<i32>} : memref<64x512xbf16, #tpu.memory_space<vmem>>, vector<48x128xbf16>,
    %c0_19 = arith.constant 0 : index
    %c0_20 = arith.constant 0 : index
    %c0_21 = arith.constant 0 : index
    %c0_22 = arith.constant 0 : index
    %16 = vector.load %arg3[%c0_19, %c0_20, %c0_21, %c0_22] : memref<1x1x17x128xbf16, #tpu.memory_space<vmem>>, vector<1x1x16x128xbf16>
    %17 = vector.shape_cast %16 : vector<1x1x16x128xbf16> to vector<16x128xbf16>
    %c48 = arith.constant 48 : index
    %c256_23 = arith.constant 256 : index
    %18 = vector.load %arg7[%c48, %c256_23] : memref<64x512xbf16, #tpu.memory_space<vmem>>, vector<16x128xbf16>
    tpu.vector_store %arg7[%c48, %c256_23], %17 {strides = array<i32>} : memref<64x512xbf16, #tpu.memory_space<vmem>>, vector<16x128xbf16>,
    %c0_24 = arith.constant 0 : index
    %c0_25 = arith.constant 0 : index
    %c1_26 = arith.constant 1 : index
    %c0_27 = arith.constant 0 : index
    %19 = vector.load %arg3[%c0_24, %c0_25, %c1_26, %c0_27] : memref<1x1x17x128xbf16, #tpu.memory_space<vmem>>, vector<1x1x16x128xbf16>
    %20 = vector.shape_cast %19 : vector<1x1x16x128xbf16> to vector<16x128xbf16>
    %c48_28 = arith.constant 48 : index
    %c384_29 = arith.constant 384 : index
    %21 = vector.load %arg7[%c48_28, %c384_29] : memref<64x512xbf16, #tpu.memory_space<vmem>>, vector<16x128xbf16>
    tpu.vector_store %arg7[%c48_28, %c384_29], %20 {strides = array<i32>} : memref<64x512xbf16, #tpu.memory_space<vmem>>, vector<16x128xbf16>,
    %c0_30 = arith.constant 0 : index
    %c0_31 = arith.constant 0 : index
    %22 = vector.load %arg7[%c0_30, %c0_31] : memref<64x512xbf16, #tpu.memory_space<vmem>>, vector<64x512xbf16>
    %c0_32 = arith.constant 0 : index
    %c0_33 = arith.constant 0 : index
    %23 = vector.load %arg4[%c0_32, %c0_33] : memref<512x128xbf16, #tpu.memory_space<vmem>>, vector<512x128xbf16>
    %cst = arith.constant dense<0.000000e+00> : vector<64x128xf32>
    %24 = tpu.matmul %22, %23, %cst {dimension_numbers = #tpu.dot_dimension_numbers<[1], [0], [0], [1], [0, 0, 1, 1], [], []>} : vector<64x512xbf16>, vector<512x128xbf16>, vector<64x128xf32> -> vector<64x128xf32>
    %c0_34 = arith.constant 0 : index
    %c0_35 = arith.constant 0 : index
    %25 = vector.load %arg5[%c0_34, %c0_35] : memref<3x128xf32, #tpu.memory_space<vmem>>, vector<1x128xf32>
    %26 = vector.broadcast %25 : vector<1x128xf32> to vector<64x128xf32>
    %27 = arith.addf %24, %26 : vector<64x128xf32>
    %cst_36 = arith.constant dense<0.000000e+00> : vector<64xf32>
    %28 = vector.multi_reduction <add>, %27, %cst_36 [1] : vector<64x128xf32> to vector<64xf32>
    %29 = vector.shape_cast %28 : vector<64xf32> to vector<64x1xf32>
    %30 = arith.mulf %27, %27 : vector<64x128xf32>
    %cst_37 = arith.constant dense<0.000000e+00> : vector<64xf32>
    %31 = vector.multi_reduction <add>, %30, %cst_37 [1] : vector<64x128xf32> to vector<64xf32>
    %32 = vector.shape_cast %31 : vector<64xf32> to vector<64x1xf32>
    %cst_38 = arith.constant 1.250000e-01 : f32
    %33 = vector.broadcast %cst_38 : f32 to vector<64x1xf32>
    %34 = arith.mulf %29, %33 : vector<64x1xf32>
    %cst_39 = arith.constant 1.250000e-01 : f32
    %35 = vector.broadcast %cst_39 : f32 to vector<64x1xf32>
    %36 = arith.mulf %32, %35 : vector<64x1xf32>
    %37 = arith.mulf %34, %34 : vector<64x1xf32>
    %38 = arith.subf %36, %37 : vector<64x1xf32>
    %cst_40 = arith.constant 9.99999974E-6 : f32
    %39 = vector.broadcast %cst_40 : f32 to vector<64x1xf32>
    %40 = arith.addf %38, %39 : vector<64x1xf32>
    %41 = math.rsqrt %40 : vector<64x1xf32>
    %c1_41 = arith.constant 1 : index
    %c0_42 = arith.constant 0 : index
    %42 = vector.load %arg5[%c1_41, %c0_42] : memref<3x128xf32, #tpu.memory_space<vmem>>, vector<1x128xf32>
    %c2 = arith.constant 2 : index
    %c0_43 = arith.constant 0 : index
    %43 = vector.load %arg5[%c2, %c0_43] : memref<3x128xf32, #tpu.memory_space<vmem>>, vector<1x128xf32>
    %44 = vector.broadcast %34 : vector<64x1xf32> to vector<64x128xf32>
    %45 = arith.subf %27, %44 : vector<64x128xf32>
    %46 = vector.broadcast %41 : vector<64x1xf32> to vector<64x128xf32>
    %47 = vector.broadcast %42 : vector<1x128xf32> to vector<64x128xf32>
    %48 = arith.mulf %46, %47 : vector<64x128xf32>
    %49 = arith.mulf %45, %48 : vector<64x128xf32>
    %50 = vector.broadcast %43 : vector<1x128xf32> to vector<64x128xf32>
    %51 = arith.addf %49, %50 : vector<64x128xf32>
    %c0_44 = arith.constant 0 : index
    %c0_45 = arith.constant 0 : index
    %c0_46 = arith.constant 0 : index
    %52 = vector.load %arg6[%c0_44, %c0_45, %c0_46] : memref<1x64x128xf32, #tpu.memory_space<vmem>>, vector<1x64x128xf32>
    %53 = vector.shape_cast %52 : vector<1x64x128xf32> to vector<64x128xf32>
    %54 = vector.shape_cast %51 : vector<64x128xf32> to vector<1x64x128xf32>
    tpu.vector_store %arg6[%c0_44, %c0_45, %c0_46], %54 {strides = array<i32>} : memref<1x64x128xf32, #tpu.memory_space<vmem>>, vector<1x64x128xf32>,
    return
  }
  func.func @transform_0(%arg0: i32, %arg1: i32) -> (i32, i32, i32, i32) {
    %c0_i32 = arith.constant 0 : i32
    %c0_i32_0 = arith.constant 0 : i32
    %c0_i32_1 = arith.constant 0 : i32
    return %arg0, %arg1, %c0_i32, %c0_i32_0 : i32, i32, i32, i32
  }
  func.func @transform_1(%arg0: i32, %arg1: i32) -> (i32, i32, i32, i32) {
    %c1_i32 = arith.constant 1 : i32
    %0 = arith.addi %arg1, %c1_i32 : i32
    %c4_i32 = arith.constant 4 : i32
    %1 = arith.muli %0, %c4_i32 : i32
    %c0_i32 = arith.constant 0 : i32
    %c0_i32_0 = arith.constant 0 : i32
    %c0_i32_1 = arith.constant 0 : i32
    return %arg0, %1, %c0_i32, %c0_i32_0 : i32, i32, i32, i32
  }
  func.func @transform_2(%arg0: i32, %arg1: i32) -> (i32, i32) {
    %c0_i32 = arith.constant 0 : i32
    %c0_i32_0 = arith.constant 0 : i32
    %c0_i32_1 = arith.constant 0 : i32
    return %c0_i32, %c0_i32_0 : i32, i32
  }
  func.func @transform_3(%arg0: i32, %arg1: i32) -> (i32, i32) {
    %c0_i32 = arith.constant 0 : i32
    %c0_i32_0 = arith.constant 0 : i32
    %c0_i32_1 = arith.constant 0 : i32
    return %c0_i32, %c0_i32_0 : i32, i32
  }
  func.func @transform_4(%arg0: i32, %arg1: i32) -> (i32, i32, i32) {
    %c0_i32 = arith.constant 0 : i32
    %c0_i32_0 = arith.constant 0 : i32
    return %arg0, %arg1, %c0_i32 : i32, i32, i32
  }
}

</mosaic_0001>

<llo_original>
// kernel: _merge_block_impl.1
$region0: #{_merge_block_impl.1}
  #allocation0 [shape = 'u32[]', space=smem, size = 0x4, offset = 0x4, fixed_abs, tag = 'smem constant byte address 0x4 - core index']
  #allocation1 [shape = 'u32[144,128]{1,0:T(1,128)}', space=vmem, size = 0x12000, scoped, tag = 'internal scratch']
  #allocation2 [shape = 'bf16[64,512]{1,0:T(8,128)(2,1)}', space=vmem, size = 0x10000, scoped, tag = 'scratch operand']
  %s0 = inlined_call_operand.vmem [shape: bf16[2,9,17,128], index: 0, kind: input, shape index: {}, may-alias: {0,1}]
  %s1 = inlined_call_operand.vmem [shape: bf16[2,9,17,128], index: 1, kind: input, shape index: {}, may-alias: {0,1}]
  %s2 = inlined_call_operand.vmem [shape: bf16[512,128], index: 2, kind: input, shape index: {}]
  %s3 = inlined_call_operand.vmem [shape: f32[3,128], index: 3, kind: input, shape index: {}]
  %s4 = inlined_call_operand.vmem [shape: f32[2,128,128], index: 4, kind: output, shape index: {}]
  %s5 = sld [smem:[#allocation0]]
  $region49: #{_merge_block_impl.1} parent=0
    _
  %s7 = ssub.s32 1, %s5
  %s8 = scalar_select 0, %s7, %s5
  loop: start=0, step=1, limit=6
  $region2: #{_merge_block_impl.1} parent=0 // loop_pre_header
    _
  $region3: #{_merge_block_impl.1} parent=0 // loop_header
    %s10 = sphi 0, %s14
    %p11 = scmp.ge.s32.totalorder %s10, 6
    %s17 = sphi 0, %s29
    %s18 = sphi 0, %s25
    %s19 = sphi 0, %s17
    %s20 = sphi 0, %s18
    %s21 = sphi 0, %s19
    %s22 = sphi 0, %s20
    %s34 = sphi 0, %s36
    %s37 = sphi 0, %s34
    %s38 = sphi 0, %s37
    %s54 = sphi 0, %s38
    %s66 = sphi 0, %s68
    %s69 = sphi 0, %s66
    %s70 = sphi 0, %s69
    %s86 = sphi 0, %s70
    %s90 = sphi 0, %s90
    %s92 = sphi 0, %s90
    %s93 = sphi 0, %s92
    %s107 = sphi 0, %s93
    %s111 = sphi 0, %s111
    %s113 = sphi 0, %s111
    %s114 = sphi 0, %s113
    %s128 = sphi 0, %s114
    %s136 = sphi 0, %s138
    %s139 = sphi 0, %s136
    %s140 = sphi 0, %s139
    %s156 = sphi 0, %s140
  $region4: #{_merge_block_impl.1} parent=0 // loop_header_branch
    %13 = sbr.rel (%p11) target = $region8
  $region5: #{_merge_block_impl.1} parent=0 // loop_body
    %s15 = ssub.s32 %s10, 1
    %s16 = ssub.s32 %s10, 2
    %s23 = sadd.s32 1, %s18
    %p24 = scmp.ge.s32.totalorder %s23, 2
    %s25 = scalar_select %p24, 0, %s23
    %s26 = sadd.s32 1, %s17
    %s27 = scalar_select %p24, %s26, %s17
    %p28 = scmp.ge.s32.totalorder %s27, 2
    %s29 = scalar_select %p28, 0, %s27
    %s30 = ssub.s32 %s17, %s29
    %s31 = ssub.s32 %s18, %s25
    %s32 = sor.u32 %s30, %s31
    %p33 = scmp.eq.s32.totalorder %s32, 0
    %s35 = sadd.s32 %s34, 1
    %s36 = scalar_select %p33, %s34, %s35
    %p39 = pneg %p33
    %p40 = scmp.eq.s32.totalorder %s10, 3
    %p41 = por %p39, %p40
    %p42 = scmp.ne.s32.totalorder %s34, %s37
    %p43 = scmp.eq.s32.totalorder %s10, 0
    %p44 = por %p42, %p43
    %p45 = scmp.ne.s32.totalorder %s34, %s37
    %p46 = scmp.eq.s32.totalorder %s15, 3
    %p47 = por %p45, %p46
    %p48 = scmp.ne.s32.totalorder %s37, %s38
    %p49 = scmp.eq.s32.totalorder %s15, 0
    %p50 = por %p48, %p49
    %p51 = scmp.ne.s32.totalorder %s37, %s38
    %p52 = scmp.eq.s32.totalorder %s16, 3
    %p53 = por %p51, %p52
    %p55 = scmp.ne.s32.totalorder %s38, %s54
    %p56 = scmp.eq.s32.totalorder %s16, 0
    %p57 = por %p55, %p56
    %s58 = sadd.s32 %s18, 1
    %s59 = smul.u32 %s58, 4
    %s60 = sadd.s32 %s25, 1
    %s61 = smul.u32 %s60, 4
    %s62 = ssub.s32 %s17, %s29
    %s63 = ssub.s32 %s59, %s61
    %s64 = sor.u32 %s62, %s63
    %p65 = scmp.eq.s32.totalorder %s64, 0
    %s67 = sadd.s32 %s66, 1
    %s68 = scalar_select %p65, %s66, %s67
    %p71 = pneg %p65
    %p72 = scmp.eq.s32.totalorder %s10, 3
    %p73 = por %p71, %p72
    %p74 = scmp.ne.s32.totalorder %s66, %s69
    %p75 = scmp.eq.s32.totalorder %s10, 0
    %p76 = por %p74, %p75
    %p77 = scmp.ne.s32.totalorder %s66, %s69
    %p78 = scmp.eq.s32.totalorder %s15, 3
    %p79 = por %p77, %p78
    %p80 = scmp.ne.s32.totalorder %s69, %s70
    %p81 = scmp.eq.s32.totalorder %s15, 0
    %p82 = por %p80, %p81
    %p83 = scmp.ne.s32.totalorder %s69, %s70
    %p84 = scmp.eq.s32.totalorder %s16, 3
    %p85 = por %p83, %p84
    %p87 = scmp.ne.s32.totalorder %s70, %s86
    %p88 = scmp.eq.s32.totalorder %s16, 0
    %p89 = por %p87, %p88
    %s91 = sadd.s32 %s90, 1
    %p94 = scmp.eq.s32.totalorder %s10, 3
    %p95 = scmp.ne.s32.totalorder %s90, %s92
    %p96 = scmp.eq.s32.totalorder %s10, 0
    %p97 = por %p95, %p96
    %p98 = scmp.ne.s32.totalorder %s90, %s92
    %p99 = scmp.eq.s32.totalorder %s15, 3
    %p100 = por %p98, %p99
    %p101 = scmp.ne.s32.totalorder %s92, %s93
    %p102 = scmp.eq.s32.totalorder %s15, 0
    %p103 = por %p101, %p102
    %p104 = scmp.ne.s32.totalorder %s92, %s93
    %p105 = scmp.eq.s32.totalorder %s16, 3
    %p106 = por %p104, %p105
    %p108 = scmp.ne.s32.totalorder %s93, %s107
    %p109 = scmp.eq.s32.totalorder %s16, 0
    %p110 = por %p108, %p109
    %s112 = sadd.s32 %s111, 1
    %p115 = scmp.eq.s32.totalorder %s10, 3
    %p116 = scmp.ne.s32.totalorder %s111, %s113
    %p117 = scmp.eq.s32.totalorder %s10, 0
    %p118 = por %p116, %p117
    %p119 = scmp.ne.s32.totalorder %s111, %s113
    %p120 = scmp.eq.s32.totalorder %s15, 3
    %p121 = por %p119, %p120
    %p122 = scmp.ne.s32.totalorder %s113, %s114
    %p123 = scmp.eq.s32.totalorder %s15, 0
    %p124 = por %p122, %p123
    %p125 = scmp.ne.s32.totalorder %s113, %s114
    %p126 = scmp.eq.s32.totalorder %s16, 3
    %p127 = por %p125, %p126
    %p129 = scmp.ne.s32.totalorder %s114, %s128
    %p130 = scmp.eq.s32.totalorder %s16, 0
    %p131 = por %p129, %p130
    %s132 = ssub.s32 %s17, %s29
    %s133 = ssub.s32 %s18, %s25
    %s134 = sor.u32 %s132, %s133
    %p135 = scmp.eq.s32.totalorder %s134, 0
    %s137 = sadd.s32 %s136, 1
    %s138 = scalar_select %p135, %s136, %s137
    %p141 = pneg %p135
    %p142 = scmp.eq.s32.totalorder %s10, 3
    %p143 = por %p141, %p142
    %p144 = scmp.ne.s32.totalorder %s136, %s139
    %p145 = scmp.eq.s32.totalorder %s10, 0
    %p146 = por %p144, %p145
    %p147 = scmp.ne.s32.totalorder %s136, %s139
    %p148 = scmp.eq.s32.totalorder %s15, 3
    %p149 = por %p147, %p148
    %p150 = scmp.ne.s32.totalorder %s139, %s140
    %p151 = scmp.eq.s32.totalorder %s15, 0
    %p152 = por %p150, %p151
    %p153 = scmp.ne.s32.totalorder %s139, %s140
    %p154 = scmp.eq.s32.totalorder %s16, 3
    %p155 = por %p153, %p154
    %p157 = scmp.ne.s32.totalorder %s140, %s156
    %p158 = scmp.eq.s32.totalorder %s16, 0
    %p159 = por %p157, %p158
    %p160 = scmp.le.s32.totalorder 1, %s10
    %p161 = scmp.lt.s32.totalorder %s10, 5
    %p162 = pnand %p160, %p161
    %p163 = pneg %p162
    // Predicated region
    $region9: #{_merge_block_impl.1} parent=5 // pred_check
      _
    $region10: #{_merge_block_impl.1} parent=5 // pred_check_branch
      %165 = sbr.rel (%p162) target = $region12
    $region11: #{_merge_block_impl.1} parent=5 // pred_region
      %s166 = ssub.s32 %s10, 1
      // Predicated region
      $region13: #{_merge_block_impl.1} parent=11 // pred_check
        %p167 = pneg %p103
      $region14: #{_merge_block_impl.1} parent=11 // pred_check_branch
        %169 = sbr.rel (%p167) target = $region16
      $region15: #{_merge_block_impl.1} parent=11 // pred_region
        _
      $region16: #{_merge_block_impl.1} parent=11 // pred_fallthru
        _
      // Predicated region
      $region17: #{_merge_block_impl.1} parent=11 // pred_check
        %p170 = pneg %p124
      $region18: #{_merge_block_impl.1} parent=11 // pred_check_branch
        %172 = sbr.rel (%p170) target = $region20
      $region19: #{_merge_block_impl.1} parent=11 // pred_region
        _
      $region20: #{_merge_block_impl.1} parent=11 // pred_fallthru
        _
    $region12: #{_merge_block_impl.1} parent=5 // pred_fallthru
      _
    %p173 = scmp.lt.s32.totalorder %s10, 4
    // Predicated region
    $region21: #{_merge_block_impl.1} parent=5 // pred_check
      %p174 = pneg %p173
    $region22: #{_merge_block_impl.1} parent=5 // pred_check_branch
      %176 = sbr.rel (%p174) target = $region24
    $region23: #{_merge_block_impl.1} parent=5 // pred_region
      // Predicated region
      $region25: #{_merge_block_impl.1} parent=23 // pred_check
        %p177 = pneg %p44
      $region26: #{_merge_block_impl.1} parent=23 // pred_check_branch
        %179 = sbr.rel (%p177) target = $region28
      $region27: #{_merge_block_impl.1} parent=23 // pred_region
        %s180 = smul.u32 4, %s18
        %s181 = ssub.s32 9, %s180
        %p182 = scmp.lt.s32.totalorder %s181, 4
        %s183 = scalar_select %p182, %s181, 4
        %s184 = smul.u32 64, %s183
        %s185 = smul.u32 %s184, 3
        %p186 = scmp.lt.s32.totalorder %s17, 1
        %s187 = scalar_select %p186, %s17, 1
        %p188 = scmp.lt.s32.totalorder %s180, 8
        %s189 = scalar_select %p188, %s180, 8
        %s190 = smul.addr %s189, 3
        %s191 = smul.addr %s187, 27
        %s192 = sadd.s32 %s190, %s191
        %s193 = smul.addr %s192, 4
        %s194 = scalar_lea.vmem %s0, %s193
        %s195 = smul.u32 4, %s18
        %s196 = ssub.s32 9, %s195
        %p197 = scmp.lt.s32.totalorder %s196, 4
        %s198 = scalar_select %p197, %s196, 4
        %s199 = smul.u32 64, %s198
        %s200 = smul.u32 %s199, 3
      $region28: #{_merge_block_impl.1} parent=23 // pred_fallthru
        _
      // Predicated region
      $region29: #{_merge_block_impl.1} parent=23 // pred_check
        %p201 = pneg %p76
      $region30: #{_merge_block_impl.1} parent=23 // pred_check_branch
        %203 = sbr.rel (%p201) target = $region32
      $region31: #{_merge_block_impl.1} parent=23 // pred_region
        %s204 = sadd.s32 %s18, 1
        %s205 = smul.u32 %s204, 4
        %p206 = scmp.lt.s32.totalorder %s17, 1
        %s207 = scalar_select %p206, %s17, 1
        %p208 = scmp.lt.s32.totalorder %s205, 8
        %s209 = scalar_select %p208, %s205, 8
        %s210 = smul.addr %s209, 3
        %s211 = smul.addr %s207, 27
        %s212 = sadd.s32 %s210, %s211
        %s213 = smul.addr %s212, 4
        %s214 = scalar_lea.vmem %s1, %s213
        %s215 = sadd.s32 %s18, 1
        %s216 = smul.u32 %s215, 4
      $region32: #{_merge_block_impl.1} parent=23 // pred_fallthru
        _
    $region24: #{_merge_block_impl.1} parent=5 // pred_fallthru
      _
    %p217 = scmp.le.s32.totalorder 1, %s10
    %p218 = scmp.lt.s32.totalorder %s10, 5
    %p219 = pnand %p217, %p218
    %p220 = pneg %p219
    // Predicated region
    $region33: #{_merge_block_impl.1} parent=5 // pred_check
      _
    $region34: #{_merge_block_impl.1} parent=5 // pred_check_branch
      %222 = sbr.rel (%p219) target = $region36
    $region35: #{_merge_block_impl.1} parent=5 // pred_region
      %s223 = ssub.s32 %s10, 1
      %s224 = smul.u32 4, %s20
      %s225 = ssub.s32 9, %s224
      %p226 = scmp.lt.s32.totalorder %s225, 4
      %s227 = scalar_select %p226, %s225, 4
      %s228 = smul.u32 64, %s227
      %s229 = smul.u32 %s228, 3
      %p230 = scmp.lt.s32.totalorder %s19, 1
      %s231 = scalar_select %p230, %s19, 1
      %p232 = scmp.lt.s32.totalorder %s224, 8
      %s233 = scalar_select %p232, %s224, 8
      %s234 = smul.addr %s233, 3
      %s235 = smul.addr %s231, 27
      %s236 = sadd.s32 %s234, %s235
      %s237 = smul.addr %s236, 4
      %s238 = scalar_lea.vmem %s0, %s237
      %p239 = pneg %p50
      %p240 = pneg %p47
      %s241 = sadd.s32 %s20, 1
      %s242 = smul.u32 %s241, 4
      %p243 = scmp.lt.s32.totalorder %s19, 1
      %s244 = scalar_select %p243, %s19, 1
      %p245 = scmp.lt.s32.totalorder %s242, 8
      %s246 = scalar_select %p245, %s242, 8
      %s247 = smul.addr %s246, 3
      %s248 = smul.addr %s244, 27
      %s249 = sadd.s32 %s247, %s248
      %s250 = smul.addr %s249, 4
      %s251 = scalar_lea.vmem %s1, %s250
      %p252 = pneg %p82
      %p253 = pneg %p79
      %p254 = pneg %p103
      %p255 = pneg %p100
      %p256 = pneg %p124
      %p257 = pneg %p121
      %p258 = pneg %p152
      %p259 = pneg %p149
      %s260 = smul.u32 8, %s20
      %p261 = scmp.lt.s32.totalorder %s19, 1
      %s262 = scalar_select %p261, %s19, 1
      %p263 = scmp.lt.s32.totalorder %s260, 15
      %s264 = scalar_select %p263, %s260, 15
      %s265 = smul.addr %s262, 16
      %s266 = sadd.s32 %s264, %s265
      %s267 = smul.addr %s266, 8
      %s268 = scalar_lea.vmem %s4, %s267
      %s269 = smul.u32 4, %s20
      %s270 = ssub.s32 9, %s269
      %p271 = scmp.lt.s32.totalorder %s270, 4
      %s272 = scalar_select %p271, %s270, 4
      %s273 = smul.u32 64, %s272
      %s274 = smul.u32 %s273, 3
      %p275 = scmp.lt.s32.totalorder %s19, 1
      %s276 = scalar_select %p275, %s19, 1
      %p277 = scmp.lt.s32.totalorder %s269, 8
      %s278 = scalar_select %p277, %s269, 8
      %s279 = smul.addr %s278, 3
      %s280 = smul.addr %s276, 27
      %s281 = sadd.s32 %s279, %s280
      %s282 = smul.addr %s281, 4
      %s283 = scalar_lea.vmem %s0, %s282
      %s284 = smul.u32 4, %s20
      %s285 = ssub.s32 9, %s284
      %p286 = scmp.lt.s32.totalorder %s285, 4
      %s287 = scalar_select %p286, %s285, 4
      %s288 = smul.u32 64, %s287
      %s289 = smul.u32 %s288, 3
      %s290 = sadd.s32 %s20, 1
      %s291 = smul.u32 %s290, 4
      %p292 = scmp.lt.s32.totalorder %s19, 1
      %s293 = scalar_select %p292, %s19, 1
      %p294 = scmp.lt.s32.totalorder %s291, 8
      %s295 = scalar_select %p294, %s291, 8
      %s296 = smul.addr %s295, 3
      %s297 = smul.addr %s293, 27
      %s298 = sadd.s32 %s296, %s297
      %s299 = smul.addr %s298, 4
      %s300 = scalar_lea.vmem %s1, %s299
      %s301 = sadd.s32 %s20, 1
      %s302 = smul.u32 %s301, 4
      %s303 = smul.u32 8, %s20
      %p304 = scmp.lt.s32.totalorder %s19, 1
      %s305 = scalar_select %p304, %s19, 1
      %p306 = scmp.lt.s32.totalorder %s303, 15
      %s307 = scalar_select %p306, %s303, 15
      %s308 = smul.addr %s305, 16
      %s309 = sadd.s32 %s307, %s308
      %s310 = smul.addr %s309, 8
      %s311 = scalar_lea.vmem %s4, %s310
      %s312 = smul.u32 8, %s20
      %v314 = vld [vmem:[%s283] sm:$0xf]
      %v315 = vld [vmem:[%s283 + $0x4] sm:$0xf]
      %v316 = vld [vmem:[%s283 + $0xc] sm:$0xf]
      %v317 = vld [vmem:[%s283 + $0x10] sm:$0xf]
      %v318 = vld [vmem:[%s283 + $0x18] sm:$0xf]
      %v319 = vld [vmem:[%s283 + $0x1c] sm:$0xf]
      %v320 = vld [vmem:[%s283 + $0x24] sm:$0xf]
      %v321 = vld [vmem:[%s283 + $0x28] sm:$0xf]
      %322 = vst [vmem:[#allocation2] sm:$0xf] %v314
      %323 = vst [vmem:[#allocation2 + $0x10] sm:$0xf] %v315
      %324 = vst [vmem:[#allocation2 + $0x20] sm:$0xf] %v316
      %325 = vst [vmem:[#allocation2 + $0x30] sm:$0xf] %v317
      %326 = vst [vmem:[#allocation2 + $0x40] sm:$0xf] %v318
      %327 = vst [vmem:[#allocation2 + $0x50] sm:$0xf] %v319
      %328 = vst [vmem:[#allocation2 + $0x60] sm:$0xf] %v320
      %329 = vst [vmem:[#allocation2 + $0x70] sm:$0xf] %v321
      %v330 = vld [vmem:[%s283] sm:$0xf]
      %v331 = vld [vmem:[%s283 + $0x4] sm:$0xf]
      %v332 = vld [vmem:[%s283 + $0x8] sm:$0x1]
      %v333 = vld [vmem:[%s283 + $0xc] sm:$0xf]
      %v334 = vld [vmem:[%s283 + $0x10] sm:$0xf]
      %v335 = vld [vmem:[%s283 + $0x14] sm:$0x1]
      %v336 = vld [vmem:[%s283 + $0x18] sm:$0xf]
      %v337 = vld [vmem:[%s283 + $0x1c] sm:$0xf]
      %v338 = vld [vmem:[%s283 + $0x20] sm:$0x1]
      %v339 = vld [vmem:[%s283 + $0x24] sm:$0xf]
      %v340 = vld [vmem:[%s283 + $0x28] sm:$0xf]
      %v341 = vld [vmem:[%s283 + $0x2c] sm:$0x1]
      %vm342 = vsmask.f32 3328
      %vm343 = vsmask.f32 7440
      %vm344 = vmor %vm342, %vm343
      %v346 = vshrl.u32 %v330, 16
      %v348 = vrot.slane %v346, 4
      %v349 = vshll.u32 %v330, 16
      %v351 = vrot.slane %v349, 5
      %v352 = vor.u32 %v348, %v351
      %v353 = vrot.slane %v352, 4
      %v355 = vshll.u32 %v331, 16
      %v357 = vrot.slane %v355, 5
      %v358 = vsel %vm344, %v353, %v357
      %v359 = vshrl.u32 %v331, 16
      %v361 = vrot.slane %v359, 4
      %v362 = vor.u32 %v361, %v357
      %v363 = vrot.slane %v362, 4
      %v365 = vshll.u32 %v332, 16
      %v367 = vrot.slane %v365, 5
      %v368 = vsel %vm344, %v363, %v367
      %v370 = vshrl.u32 %v333, 16
      %v372 = vrot.slane %v370, 4
      %v373 = vshll.u32 %v333, 16
      %v375 = vrot.slane %v373, 5
      %v376 = vor.u32 %v372, %v375
      %v377 = vrot.slane %v376, 4
      %v379 = vshll.u32 %v334, 16
      %v381 = vrot.slane %v379, 5
      %v382 = vsel %vm344, %v377, %v381
      %v383 = vshrl.u32 %v334, 16
      %v385 = vrot.slane %v383, 4
      %v386 = vor.u32 %v385, %v381
      %v387 = vrot.slane %v386, 4
      %v389 = vshll.u32 %v335, 16
      %v391 = vrot.slane %v389, 5
      %v392 = vsel %vm344, %v387, %v391
      %v394 = vshrl.u32 %v336, 16
      %v396 = vrot.slane %v394, 4
      %v397 = vshll.u32 %v336, 16
      %v399 = vrot.slane %v397, 5
      %v400 = vor.u32 %v396, %v399
      %v401 = vrot.slane %v400, 4
      %v403 = vshll.u32 %v337, 16
      %v405 = vrot.slane %v403, 5
      %v406 = vsel %vm344, %v401, %v405
      %v407 = vshrl.u32 %v337, 16
      %v409 = vrot.slane %v407, 4
      %v410 = vor.u32 %v409, %v405
      %v411 = vrot.slane %v410, 4
      %v413 = vshll.u32 %v338, 16
      %v415 = vrot.slane %v413, 5
      %v416 = vsel %vm344, %v411, %v415
      %v418 = vshrl.u32 %v339, 16
      %v420 = vrot.slane %v418, 4
      %v421 = vshll.u32 %v339, 16
      %v423 = vrot.slane %v421, 5
      %v424 = vor.u32 %v420, %v423
      %v425 = vrot.slane %v424, 4
      %v427 = vshll.u32 %v340, 16
      %v429 = vrot.slane %v427, 5
      %v430 = vsel %vm344, %v425, %v429
      %v431 = vshrl.u32 %v340, 16
      %v433 = vrot.slane %v431, 4
      %v434 = vor.u32 %v433, %v429
      %v435 = vrot.slane %v434, 4
      %v437 = vshll.u32 %v341, 16
      %v439 = vrot.slane %v437, 5
      %v440 = vsel %vm344, %v435, %v439
      %449 = vst [vmem:[#allocation2 + $0x4] sm:$0xf] %v358
      %450 = vst [vmem:[#allocation2 + $0x14] sm:$0xf] %v368
      %451 = vst [vmem:[#allocation2 + $0x24] sm:$0xf] %v382
      %452 = vst [vmem:[#allocation2 + $0x34] sm:$0xf] %v392
      %453 = vst [vmem:[#allocation2 + $0x44] sm:$0xf] %v406
      %454 = vst [vmem:[#allocation2 + $0x54] sm:$0xf] %v416
      %455 = vst [vmem:[#allocation2 + $0x64] sm:$0xf] %v430
      %456 = vst [vmem:[#allocation2 + $0x74] sm:$0xf] %v440
      %s457 = scalar_lea.vmem %s283, 12
      %v458 = vld [vmem:[%s457] sm:$0xf]
      %v459 = vld [vmem:[%s457 + $0x4] sm:$0xf]
      %v460 = vld [vmem:[%s457 + $0xc] sm:$0xf]
      %v461 = vld [vmem:[%s457 + $0x10] sm:$0xf]
      %v462 = vld [vmem:[%s457 + $0x18] sm:$0xf]
      %v463 = vld [vmem:[%s457 + $0x1c] sm:$0xf]
      %464 = vst [vmem:[#allocation2 + $0x8] sm:$0xf] %v458
      %465 = vst [vmem:[#allocation2 + $0x18] sm:$0xf] %v459
      %466 = vst [vmem:[#allocation2 + $0x28] sm:$0xf] %v460
      %467 = vst [vmem:[#allocation2 + $0x38] sm:$0xf] %v461
      %468 = vst [vmem:[#allocation2 + $0x48] sm:$0xf] %v462
      %469 = vst [vmem:[#allocation2 + $0x58] sm:$0xf] %v463
      %v470 = vld [vmem:[%s457] sm:$0xf]
      %v471 = vld [vmem:[%s457 + $0x4] sm:$0xf]
      %v472 = vld [vmem:[%s457 + $0x8] sm:$0x1]
      %v473 = vld [vmem:[%s457 + $0xc] sm:$0xf]
      %v474 = vld [vmem:[%s457 + $0x10] sm:$0xf]
      %v475 = vld [vmem:[%s457 + $0x14] sm:$0x1]
      %v476 = vld [vmem:[%s457 + $0x18] sm:$0xf]
      %v477 = vld [vmem:[%s457 + $0x1c] sm:$0xf]
      %v478 = vld [vmem:[%s457 + $0x20] sm:$0x1]
      %v480 = vshrl.u32 %v470, 16
      %v482 = vrot.slane %v480, 4
      %v483 = vshll.u32 %v470, 16
      %v485 = vrot.slane %v483, 5
      %v486 = vor.u32 %v482, %v485
      %v487 = vrot.slane %v486, 4
      %v489 = vshll.u32 %v471, 16
      %v491 = vrot.slane %v489, 5
      %v492 = vsel %vm344, %v487, %v491
      %v493 = vshrl.u32 %v471, 16
      %v495 = vrot.slane %v493, 4
      %v496 = vor.u32 %v495, %v491
      %v497 = vrot.slane %v496, 4
      %v499 = vshll.u32 %v472, 16
      %v501 = vrot.slane %v499, 5
      %v502 = vsel %vm344, %v497, %v501
      %v504 = vshrl.u32 %v473, 16
      %v506 = vrot.slane %v504, 4
      %v507 = vshll.u32 %v473, 16
      %v509 = vrot.slane %v507, 5
      %v510 = vor.u32 %v506, %v509
      %v511 = vrot.slane %v510, 4
      %v513 = vshll.u32 %v474, 16
      %v515 = vrot.slane %v513, 5
      %v516 = vsel %vm344, %v511, %v515
      %v517 = vshrl.u32 %v474, 16
      %v519 = vrot.slane %v517, 4
      %v520 = vor.u32 %v519, %v515
      %v521 = vrot.slane %v520, 4
      %v523 = vshll.u32 %v475, 16
      %v525 = vrot.slane %v523, 5
      %v526 = vsel %vm344, %v521, %v525
      %v528 = vshrl.u32 %v476, 16
      %v530 = vrot.slane %v528, 4
      %v531 = vshll.u32 %v476, 16
      %v533 = vrot.slane %v531, 5
      %v534 = vor.u32 %v530, %v533
      %v535 = vrot.slane %v534, 4
      %v537 = vshll.u32 %v477, 16
      %v539 = vrot.slane %v537, 5
      %v540 = vsel %vm344, %v535, %v539
      %v541 = vshrl.u32 %v477, 16
      %v543 = vrot.slane %v541, 4
      %v544 = vor.u32 %v543, %v539
      %v545 = vrot.slane %v544, 4
      %v547 = vshll.u32 %v478, 16
      %v549 = vrot.slane %v547, 5
      %v550 = vsel %vm344, %v545, %v549
      %557 = vst [vmem:[#allocation2 + $0xc] sm:$0xf] %v492
      %558 = vst [vmem:[#allocation2 + $0x1c] sm:$0xf] %v502
      %559 = vst [vmem:[#allocation2 + $0x2c] sm:$0xf] %v516
      %560 = vst [vmem:[#allocation2 + $0x3c] sm:$0xf] %v526
      %561 = vst [vmem:[#allocation2 + $0x4c] sm:$0xf] %v540
      %562 = vst [vmem:[#allocation2 + $0x5c] sm:$0xf] %v550
      %v563 = vld [vmem:[%s300] sm:$0xf]
      %v564 = vld [vmem:[%s300 + $0x4] sm:$0xf]
      %565 = vst [vmem:[#allocation2 + $0x68] sm:$0xf] %v563
      %566 = vst [vmem:[#allocation2 + $0x78] sm:$0xf] %v564
      %v567 = vld [vmem:[%s300] sm:$0xf]
      %v568 = vld [vmem:[%s300 + $0x4] sm:$0xf]
      %v569 = vld [vmem:[%s300 + $0x8] sm:$0x1]
      %v571 = vshrl.u32 %v567, 16
      %v573 = vrot.slane %v571, 4
      %v574 = vshll.u32 %v567, 16
      %v576 = vrot.slane %v574, 5
      %v577 = vor.u32 %v573, %v576
      %v578 = vrot.slane %v577, 4
      %v580 = vshll.u32 %v568, 16
      %v582 = vrot.slane %v580, 5
      %v583 = vsel %vm344, %v578, %v582
      %v584 = vshrl.u32 %v568, 16
      %v586 = vrot.slane %v584, 4
      %v587 = vor.u32 %v586, %v582
      %v588 = vrot.slane %v587, 4
      %v590 = vshll.u32 %v569, 16
      %v592 = vrot.slane %v590, 5
      %v593 = vsel %vm344, %v588, %v592
      %596 = vst [vmem:[#allocation2 + $0x6c] sm:$0xf] %v583
      %597 = vst [vmem:[#allocation2 + $0x7c] sm:$0xf] %v593
      %v598 = vld [vmem:[#allocation2] sm:$0xff]
      %v599 = vld [vmem:[#allocation2 + $0x8] sm:$0xff]
      %v600 = vld [vmem:[#allocation2 + $0x10] sm:$0xff]
      %v601 = vld [vmem:[#allocation2 + $0x18] sm:$0xff]
      %v602 = vld [vmem:[#allocation2 + $0x20] sm:$0xff]
      %v603 = vld [vmem:[#allocation2 + $0x28] sm:$0xff]
      %v604 = vld [vmem:[#allocation2 + $0x30] sm:$0xff]
      %v605 = vld [vmem:[#allocation2 + $0x38] sm:$0xff]
      %v606 = vld [vmem:[#allocation2 + $0x40] sm:$0xff]
      %v607 = vld [vmem:[#allocation2 + $0x48] sm:$0xff]
      %v608 = vld [vmem:[#allocation2 + $0x50] sm:$0xff]
      %v609 = vld [vmem:[#allocation2 + $0x58] sm:$0xff]
      %v610 = vld [vmem:[#allocation2 + $0x60] sm:$0xff]
      %v611 = vld [vmem:[#allocation2 + $0x68] sm:$0xff]
      %v612 = vld [vmem:[#allocation2 + $0x70] sm:$0xff]
      %v613 = vld [vmem:[#allocation2 + $0x78] sm:$0xff]
      %v614 = vld [vmem:[%s2] sm:$0xf]
      %v615 = vld [vmem:[%s2 + $0x4] sm:$0xf]
      %v616 = vld [vmem:[%s2 + $0x8] sm:$0xf]
      %v617 = vld [vmem:[%s2 + $0xc] sm:$0xf]
      %v618 = vld [vmem:[%s2 + $0x10] sm:$0xf]
      %v619 = vld [vmem:[%s2 + $0x14] sm:$0xf]
      %v620 = vld [vmem:[%s2 + $0x18] sm:$0xf]
      %v621 = vld [vmem:[%s2 + $0x1c] sm:$0xf]
      %v622 = vld [vmem:[%s2 + $0x20] sm:$0xf]
      %v623 = vld [vmem:[%s2 + $0x24] sm:$0xf]
      %v624 = vld [vmem:[%s2 + $0x28] sm:$0xf]
      %v625 = vld [vmem:[%s2 + $0x2c] sm:$0xf]
      %v626 = vld [vmem:[%s2 + $0x30] sm:$0xf]
      %v627 = vld [vmem:[%s2 + $0x34] sm:$0xf]
      %v628 = vld [vmem:[%s2 + $0x38] sm:$0xf]
      %v629 = vld [vmem:[%s2 + $0x3c] sm:$0xf]
      %v630 = vld [vmem:[%s2 + $0x40] sm:$0xf]
      %v631 = vld [vmem:[%s2 + $0x44] sm:$0xf]
      %v632 = vld [vmem:[%s2 + $0x48] sm:$0xf]
      %v633 = vld [vmem:[%s2 + $0x4c] sm:$0xf]
      %v634 = vld [vmem:[%s2 + $0x50] sm:$0xf]
      %v635 = vld [vmem:[%s2 + $0x54] sm:$0xf]
      %v636 = vld [vmem:[%s2 + $0x58] sm:$0xf]
      %v637 = vld [vmem:[%s2 + $0x5c] sm:$0xf]
      %v638 = vld [vmem:[%s2 + $0x60] sm:$0xf]
      %v639 = vld [vmem:[%s2 + $0x64] sm:$0xf]
      %v640 = vld [vmem:[%s2 + $0x68] sm:$0xf]
      %v641 = vld [vmem:[%s2 + $0x6c] sm:$0xf]
      %v642 = vld [vmem:[%s2 + $0x70] sm:$0xf]
      %v643 = vld [vmem:[%s2 + $0x74] sm:$0xf]
      %v644 = vld [vmem:[%s2 + $0x78] sm:$0xf]
      %v645 = vld [vmem:[%s2 + $0x7c] sm:$0xf]
      %v646 = vld [vmem:[%s2 + $0x80] sm:$0xf]
      %v647 = vld [vmem:[%s2 + $0x84] sm:$0xf]
      %v648 = vld [vmem:[%s2 + $0x88] sm:$0xf]
      %v649 = vld [vmem:[%s2 + $0x8c] sm:$0xf]
      %v650 = vld [vmem:[%s2 + $0x90] sm:$0xf]
      %v651 = vld [vmem:[%s2 + $0x94] sm:$0xf]
      %v652 = vld [vmem:[%s2 + $0x98] sm:$0xf]
      %v653 = vld [vmem:[%s2 + $0x9c] sm:$0xf]
      %v654 = vld [vmem:[%s2 + $0xa0] sm:$0xf]
      %v655 = vld [vmem:[%s2 + $0xa4] sm:$0xf]
      %v656 = vld [vmem:[%s2 + $0xa8] sm:$0xf]
      %v657 = vld [vmem:[%s2 + $0xac] sm:$0xf]
      %v658 = vld [vmem:[%s2 + $0xb0] sm:$0xf]
      %v659 = vld [vmem:[%s2 + $0xb4] sm:$0xf]
      %v660 = vld [vmem:[%s2 + $0xb8] sm:$0xf]
      %v661 = vld [vmem:[%s2 + $0xbc] sm:$0xf]
      %v662 = vld [vmem:[%s2 + $0xc0] sm:$0xf]
      %v663 = vld [vmem:[%s2 + $0xc4] sm:$0xf]
      %v664 = vld [vmem:[%s2 + $0xc8] sm:$0xf]
      %v665 = vld [vmem:[%s2 + $0xcc] sm:$0xf]
      %v666 = vld [vmem:[%s2 + $0xd0] sm:$0xf]
      %v667 = vld [vmem:[%s2 + $0xd4] sm:$0xf]
      %v668 = vld [vmem:[%s2 + $0xd8] sm:$0xf]
      %v669 = vld [vmem:[%s2 + $0xdc] sm:$0xf]
      %v670 = vld [vmem:[%s2 + $0xe0] sm:$0xf]
      %v671 = vld [vmem:[%s2 + $0xe4] sm:$0xf]
      %v672 = vld [vmem:[%s2 + $0xe8] sm:$0xf]
      %v673 = vld [vmem:[%s2 + $0xec] sm:$0xf]
      %v674 = vld [vmem:[%s2 + $0xf0] sm:$0xf]
      %v675 = vld [vmem:[%s2 + $0xf4] sm:$0xf]
      %v676 = vld [vmem:[%s2 + $0xf8] sm:$0xf]
      %v677 = vld [vmem:[%s2 + $0xfc] sm:$0xf]
      %v678 = vld [vmem:[%s3] sm:$0x1]
      %v679 = vlaneseq
      %v680 = vshrl.u32 %v679, 7
      %v681 = vsub.s32 0, %v680
      %v682 = vrot.slane %v678, %v681
      %v699 = vunpack.c.l.b16 %v598
      %v700 = vunpack.c.h.b16 %v598
      %v701 = vunpack.c.l.b16 %v599
      %v702 = vunpack.c.h.b16 %v599
      %v703 = vunpack.c.l.b16 %v600
      %v704 = vunpack.c.h.b16 %v600
      %v705 = vunpack.c.l.b16 %v601
      %v706 = vunpack.c.h.b16 %v601
      %v707 = vunpack.c.l.b16 %v602
      %v708 = vunpack.c.h.b16 %v602
      %v709 = vunpack.c.l.b16 %v603
      %v710 = vunpack.c.h.b16 %v603
      %v711 = vunpack.c.l.b16 %v604
      %v712 = vunpack.c.h.b16 %v604
      %v713 = vunpack.c.l.b16 %v605
      %v714 = vunpack.c.h.b16 %v605
      %v715 = vunpack.c.l.b16 %v606
      %v716 = vunpack.c.h.b16 %v606
      %v717 = vunpack.c.l.b16 %v607
      %v718 = vunpack.c.h.b16 %v607
      %v719 = vunpack.c.l.b16 %v608
      %v720 = vunpack.c.h.b16 %v608
      %v721 = vunpack.c.l.b16 %v609
      %v722 = vunpack.c.h.b16 %v609
      %v723 = vunpack.c.l.b16 %v610
      %v724 = vunpack.c.h.b16 %v610
      %v725 = vunpack.c.l.b16 %v611
      %v726 = vunpack.c.h.b16 %v611
      %v727 = vunpack.c.l.b16 %v612
      %v728 = vunpack.c.h.b16 %v612
      %v729 = vunpack.c.l.b16 %v613
      %v730 = vunpack.c.h.b16 %v613
      %v731 = vpack.c.b16 %v703, %v699
      %v732 = vpack.c.b16 %v704, %v700
      %v733 = vpack.c.b16 %v705, %v701
      %v734 = vpack.c.b16 %v706, %v702
      %v735 = vpack.c.b16 %v711, %v707
      %v736 = vpack.c.b16 %v712, %v708
      %v737 = vpack.c.b16 %v713, %v709
      %v738 = vpack.c.b16 %v714, %v710
      %v739 = vpack.c.b16 %v719, %v715
      %v740 = vpack.c.b16 %v720, %v716
      %v741 = vpack.c.b16 %v721, %v717
      %v742 = vpack.c.b16 %v722, %v718
      %v743 = vpack.c.b16 %v727, %v723
      %v744 = vpack.c.b16 %v728, %v724
      %v745 = vpack.c.b16 %v729, %v725
      %v746 = vpack.c.b16 %v730, %v726
      %v827 = vunpack.c.l.b16 %v614
      %v828 = vunpack.c.l.b16 %v615
      %v829 = vunpack.c.l.b16 %v616
      %v830 = vunpack.c.l.b16 %v617
      %v831 = vunpack.c.l.b16 %v618
      %v832 = vunpack.c.l.b16 %v619
      %v833 = vunpack.c.l.b16 %v620
      %v834 = vunpack.c.l.b16 %v621
      %v835 = vunpack.c.l.b16 %v622
      %v836 = vunpack.c.l.b16 %v623
      %v837 = vunpack.c.l.b16 %v624
      %v838 = vunpack.c.l.b16 %v625
      %v839 = vunpack.c.l.b16 %v626
      %v840 = vunpack.c.l.b16 %v627
      %v841 = vunpack.c.l.b16 %v628
      %v842 = vunpack.c.l.b16 %v629
      %v843 = vunpack.c.l.b16 %v630
      %v844 = vunpack.c.l.b16 %v631
      %v845 = vunpack.c.l.b16 %v632
      %v846 = vunpack.c.l.b16 %v633
      %v847 = vunpack.c.l.b16 %v634
      %v848 = vunpack.c.l.b16 %v635
      %v849 = vunpack.c.l.b16 %v636
      %v850 = vunpack.c.l.b16 %v637
      %v851 = vunpack.c.l.b16 %v638
      %v852 = vunpack.c.l.b16 %v639
      %v853 = vunpack.c.l.b16 %v640
      %v854 = vunpack.c.l.b16 %v641
      %v855 = vunpack.c.l.b16 %v642
      %v856 = vunpack.c.l.b16 %v643
      %v857 = vunpack.c.l.b16 %v644
      %v858 = vunpack.c.l.b16 %v645
      %v859 = vunpack.c.l.b16 %v646
      %v860 = vunpack.c.l.b16 %v647
      %v861 = vunpack.c.l.b16 %v648
      %v862 = vunpack.c.l.b16 %v649
      %v863 = vunpack.c.l.b16 %v650
      %v864 = vunpack.c.l.b16 %v651
      %v865 = vunpack.c.l.b16 %v652
      %v866 = vunpack.c.l.b16 %v653
      %v867 = vunpack.c.l.b16 %v654
      %v868 = vunpack.c.l.b16 %v655
      %v869 = vunpack.c.l.b16 %v656
      %v870 = vunpack.c.l.b16 %v657
      %v871 = vunpack.c.l.b16 %v658
      %v872 = vunpack.c.l.b16 %v659
      %v873 = vunpack.c.l.b16 %v660
      %v874 = vunpack.c.l.b16 %v661
      %v875 = vunpack.c.l.b16 %v662
      %v876 = vunpack.c.l.b16 %v663
      %v877 = vunpack.c.l.b16 %v664
      %v878 = vunpack.c.l.b16 %v665
      %v879 = vunpack.c.l.b16 %v666
      %v880 = vunpack.c.l.b16 %v667
      %v881 = vunpack.c.l.b16 %v668
      %v882 = vunpack.c.l.b16 %v669
      %v883 = vunpack.c.l.b16 %v670
      %v884 = vunpack.c.l.b16 %v671
      %v885 = vunpack.c.l.b16 %v672
      %v886 = vunpack.c.l.b16 %v673
      %v887 = vunpack.c.l.b16 %v674
      %v888 = vunpack.c.l.b16 %v675
      %v889 = vunpack.c.l.b16 %v676
      %v890 = vunpack.c.l.b16 %v677
      %v891 = vpack.c.b16 %v828, %v827
      %v892 = vpack.c.b16 %v830, %v829
      %v893 = vpack.c.b16 %v832, %v831
      %v894 = vpack.c.b16 %v834, %v833
      %v895 = vpack.c.b16 %v836, %v835
      %v896 = vpack.c.b16 %v838, %v837
      %v897 = vpack.c.b16 %v840, %v839
      %v898 = vpack.c.b16 %v842, %v841
      %v899 = vpack.c.b16 %v844, %v843
      %v900 = vpack.c.b16 %v846, %v845
      %v901 = vpack.c.b16 %v848, %v847
      %v902 = vpack.c.b16 %v850, %v849
      %v903 = vpack.c.b16 %v852, %v851
      %v904 = vpack.c.b16 %v854, %v853
      %v905 = vpack.c.b16 %v856, %v855
      %v906 = vpack.c.b16 %v858, %v857
      %v907 = vpack.c.b16 %v860, %v859
      %v908 = vpack.c.b16 %v862, %v861
      %v909 = vpack.c.b16 %v864, %v863
      %v910 = vpack.c.b16 %v866, %v865
      %v911 = vpack.c.b16 %v868, %v867
      %v912 = vpack.c.b16 %v870, %v869
      %v913 = vpack.c.b16 %v872, %v871
      %v914 = vpack.c.b16 %v874, %v873
      %v915 = vpack.c.b16 %v876, %v875
      %v916 = vpack.c.b16 %v878, %v877
      %v917 = vpack.c.b16 %v880, %v879
      %v918 = vpack.c.b16 %v882, %v881
      %v919 = vpack.c.b16 %v884, %v883
      %v920 = vpack.c.b16 %v886, %v885
      %v921 = vpack.c.b16 %v888, %v887
      %v922 = vpack.c.b16 %v890, %v889
      %955 = vmatprep.subr.bf16.mxu0 0
      %956 = vmatpush1.bf16.msra.mxu0 %v898
      %957 = vmatprep.subr.bf16.mxu0 0
      %958 = vmatpush1.bf16.msra.mxu0 %v897
      %959 = vmatprep.subr.bf16.mxu0 0
      %960 = vmatpush1.bf16.msra.mxu0 %v896
      %961 = vmatprep.subr.bf16.mxu0 0
      %962 = vmatpush1.bf16.msra.mxu0 %v895
      %963 = vmatprep.subr.bf16.mxu0 0
      %964 = vmatpush1.bf16.msra.mxu0 %v894
      %965 = vmatprep.subr.bf16.mxu0 0
      %966 = vmatpush1.bf16.msra.mxu0 %v893
      %967 = vmatprep.subr.bf16.mxu0 0
      %968 = vmatpush1.bf16.msra.mxu0 %v892
      %969 = vmatprep.subr.bf16.mxu0 0
      %970 = vmatpush1.bf16.msra.mxu0 %v891
      %971 = vmatprep.subr.bf16.mxu0 0
      %972 = vmatpush2.bf16.msra.mxu0 %v906
      %973 = vmatprep.subr.bf16.mxu0 0
      %974 = vmatpush2.bf16.msra.mxu0 %v905
      %975 = vmatprep.subr.bf16.mxu0 0
      %976 = vmatpush2.bf16.msra.mxu0 %v904
      %977 = vmatprep.subr.bf16.mxu0 0
      %978 = vmatpush2.bf16.msra.mxu0 %v903
      %979 = vmatprep.subr.bf16.mxu0 0
      %980 = vmatpush2.bf16.msra.mxu0 %v902
      %981 = vmatprep.subr.bf16.mxu0 0
      %982 = vmatpush2.bf16.msra.mxu0 %v901
      %983 = vmatprep.subr.bf16.mxu0 0
      %984 = vmatpush2.bf16.msra.mxu0 %v900
      %985 = vmatprep.subr.bf16.mxu0 0
      %986 = vmatpush2.bf16.msra.mxu0 %v899
      %987 = vmatprep.mubr.bf16.mxu0 %v732
      %988 = vmatmul.mubr.bf16.gmra.mxu0 %v731
      %v989 = vpop.f32.mrf.mxu0
      %v990 = vadd.f32 %v682, %v989
      %v991 = vpop.f32.mrf.mxu0
      %v992 = vpop.f32.mrf.mxu0
      %v993 = vadd.f32 %v682, %v992
      %v994 = vpop.f32.mrf.mxu0
      %995 = vmatprep.mubr.bf16.mxu0 %v736
      %996 = vmatmul.mubr.bf16.gmra.mxu0 %v735
      %v997 = vpop.f32.mrf.mxu0
      %v998 = vadd.f32 %v682, %v997
      %v999 = vpop.f32.mrf.mxu0
      %v1000 = vpop.f32.mrf.mxu0
      %v1001 = vadd.f32 %v682, %v1000
      %v1002 = vpop.f32.mrf.mxu0
      %1003 = vmatprep.mubr.bf16.mxu0 %v740
      %1004 = vmatmul.mubr.bf16.gmra.mxu0 %v739
      %v1005 = vpop.f32.mrf.mxu0
      %v1006 = vadd.f32 %v682, %v1005
      %v1007 = vpop.f32.mrf.mxu0
      %v1008 = vpop.f32.mrf.mxu0
      %v1009 = vadd.f32 %v682, %v1008
      %v1010 = vpop.f32.mrf.mxu0
      %1011 = vmatprep.mubr.bf16.mxu0 %v744
      %1012 = vmatmul.mubr.bf16.gmra.mxu0 %v743
      %v1013 = vpop.f32.mrf.mxu0
      %v1014 = vadd.f32 %v682, %v1013
      %v1015 = vpop.f32.mrf.mxu0
      %v1016 = vpop.f32.mrf.mxu0
      %v1017 = vadd.f32 %v682, %v1016
      %v1018 = vpop.f32.mrf.mxu0
      %1019 = vdwg.mxu0
      %1020 = vmatprep.subr.bf16.mxu0 0
      %1021 = vmatpush1.bf16.msra.mxu0 %v914
      %1022 = vmatprep.subr.bf16.mxu0 0
      %1023 = vmatpush1.bf16.msra.mxu0 %v913
      %1024 = vmatprep.subr.bf16.mxu0 0
      %1025 = vmatpush1.bf16.msra.mxu0 %v912
      %1026 = vmatprep.subr.bf16.mxu0 0
      %1027 = vmatpush1.bf16.msra.mxu0 %v911
      %1028 = vmatprep.subr.bf16.mxu0 0
      %1029 = vmatpush1.bf16.msra.mxu0 %v910
      %1030 = vmatprep.subr.bf16.mxu0 0
      %1031 = vmatpush1.bf16.msra.mxu0 %v909
      %1032 = vmatprep.subr.bf16.mxu0 0
      %1033 = vmatpush1.bf16.msra.mxu0 %v908
      %1034 = vmatprep.subr.bf16.mxu0 0
      %1035 = vmatpush1.bf16.msra.mxu0 %v907
      %1036 = vmatprep.subr.bf16.mxu0 0
      %1037 = vmatpush2.bf16.msra.mxu0 %v922
      %1038 = vmatprep.subr.bf16.mxu0 0
      %1039 = vmatpush2.bf16.msra.mxu0 %v921
      %1040 = vmatprep.subr.bf16.mxu0 0
      %1041 = vmatpush2.bf16.msra.mxu0 %v920
      %1042 = vmatprep.subr.bf16.mxu0 0
      %1043 = vmatpush2.bf16.msra.mxu0 %v919
      %1044 = vmatprep.subr.bf16.mxu0 0
      %1045 = vmatpush2.bf16.msra.mxu0 %v918
      %1046 = vmatprep.subr.bf16.mxu0 0
      %1047 = vmatpush2.bf16.msra.mxu0 %v917
      %1048 = vmatprep.subr.bf16.mxu0 0
      %1049 = vmatpush2.bf16.msra.mxu0 %v916
      %1050 = vmatprep.subr.bf16.mxu0 0
      %1051 = vmatpush2.bf16.msra.mxu0 %v915
      %1052 = vmatprep.mubr.bf16.mxu0 %v734
      %1053 = vmatmul.mubr.bf16.gmra.mxu0 %v733
      %v1054 = vpop.f32.mrf.mxu0
      %v1055 = vadd.f32 %v990, %v1054
      %v1056 = vpop.f32.mrf.mxu0
      %v1057 = vpop.f32.mrf.mxu0
      %v1058 = vadd.f32 %v993, %v1057
      %v1059 = vpop.f32.mrf.mxu0
      %1060 = vmatprep.mubr.bf16.mxu0 %v738
      %1061 = vmatmul.mubr.bf16.gmra.mxu0 %v737
      %v1062 = vpop.f32.mrf.mxu0
      %v1063 = vadd.f32 %v998, %v1062
      %v1064 = vpop.f32.mrf.mxu0
      %v1065 = vpop.f32.mrf.mxu0
      %v1066 = vadd.f32 %v1001, %v1065
      %v1067 = vpop.f32.mrf.mxu0
      %1068 = vmatprep.mubr.bf16.mxu0 %v742
      %1069 = vmatmul.mubr.bf16.gmra.mxu0 %v741
      %v1070 = vpop.f32.mrf.mxu0
      %v1071 = vadd.f32 %v1006, %v1070
      %v1072 = vpop.f32.mrf.mxu0
      %v1073 = vpop.f32.mrf.mxu0
      %v1074 = vadd.f32 %v1009, %v1073
      %v1075 = vpop.f32.mrf.mxu0
      %1076 = vmatprep.mubr.bf16.mxu0 %v746
      %1077 = vmatmul.mubr.bf16.gmra.mxu0 %v745
      %v1078 = vpop.f32.mrf.mxu0
      %v1079 = vadd.f32 %v1014, %v1078
      %v1080 = vpop.f32.mrf.mxu0
      %v1081 = vpop.f32.mrf.mxu0
      %v1082 = vadd.f32 %v1017, %v1081
      %v1083 = vpop.f32.mrf.mxu0
      %1084 = vdwg.mxu0
      %1085 = vadd.xlane.f32.xlu0 %v1055
      %v1086 = vpop.xlane.xlu0 %1085
      %1087 = vadd.xlane.f32.xlu0 %v1058
      %v1088 = vpop.xlane.xlu0 %1087
      %1089 = vadd.xlane.f32.xlu0 %v1063
      %v1090 = vpop.xlane.xlu0 %1089
      %1091 = vadd.xlane.f32.xlu0 %v1066
      %v1092 = vpop.xlane.xlu0 %1091
      %1093 = vadd.xlane.f32.xlu0 %v1071
      %v1094 = vpop.xlane.xlu0 %1093
      %1095 = vadd.xlane.f32.xlu0 %v1074
      %v1096 = vpop.xlane.xlu0 %1095
      %1097 = vadd.xlane.f32.xlu0 %v1079
      %v1098 = vpop.xlane.xlu0 %1097
      %1099 = vadd.xlane.f32.xlu0 %v1082
      %v1100 = vpop.xlane.xlu0 %1099
      %v1101 = vmul.f32 %v1055, %v1055
      %v1102 = vmul.f32 %v1058, %v1058
      %v1103 = vmul.f32 %v1063, %v1063
      %v1104 = vmul.f32 %v1066, %v1066
      %v1105 = vmul.f32 %v1071, %v1071
      %v1106 = vmul.f32 %v1074, %v1074
      %v1107 = vmul.f32 %v1079, %v1079
      %v1108 = vmul.f32 %v1082, %v1082
      %1109 = vadd.xlane.f32.xlu0 %v1101
      %v1110 = vpop.xlane.xlu0 %1109
      %1111 = vadd.xlane.f32.xlu0 %v1102
      %v1112 = vpop.xlane.xlu0 %1111
      %1113 = vadd.xlane.f32.xlu0 %v1103
      %v1114 = vpop.xlane.xlu0 %1113
      %1115 = vadd.xlane.f32.xlu0 %v1104
      %v1116 = vpop.xlane.xlu0 %1115
      %1117 = vadd.xlane.f32.xlu0 %v1105
      %v1118 = vpop.xlane.xlu0 %1117
      %1119 = vadd.xlane.f32.xlu0 %v1106
      %v1120 = vpop.xlane.xlu0 %1119
      %1121 = vadd.xlane.f32.xlu0 %v1107
      %v1122 = vpop.xlane.xlu0 %1121
      %1123 = vadd.xlane.f32.xlu0 %v1108
      %v1124 = vpop.xlane.xlu0 %1123
      %v1125 = vmul.f32 %v1086, 0.125
      %v1126 = vmul.f32 %v1088, 0.125
      %v1127 = vmul.f32 %v1090, 0.125
      %v1128 = vmul.f32 %v1092, 0.125
      %v1129 = vmul.f32 %v1094, 0.125
      %v1130 = vmul.f32 %v1096, 0.125
      %v1131 = vmul.f32 %v1098, 0.125
      %v1132 = vmul.f32 %v1100, 0.125
      %v1133 = vmul.f32 %v1110, 0.125
      %v1134 = vmul.f32 %v1112, 0.125
      %v1135 = vmul.f32 %v1114, 0.125
      %v1136 = vmul.f32 %v1116, 0.125
      %v1137 = vmul.f32 %v1118, 0.125
      %v1138 = vmul.f32 %v1120, 0.125
      %v1139 = vmul.f32 %v1122, 0.125
      %v1140 = vmul.f32 %v1124, 0.125
      %v1141 = vmul.f32 %v1125, %v1125
      %v1142 = vmul.f32 %v1126, %v1126
      %v1143 = vmul.f32 %v1127, %v1127
      %v1144 = vmul.f32 %v1128, %v1128
      %v1145 = vmul.f32 %v1129, %v1129
      %v1146 = vmul.f32 %v1130, %v1130
      %v1147 = vmul.f32 %v1131, %v1131
      %v1148 = vmul.f32 %v1132, %v1132
      %v1149 = vsub.f32 %v1133, %v1141
      %v1150 = vsub.f32 %v1134, %v1142
      %v1151 = vsub.f32 %v1135, %v1143
      %v1152 = vsub.f32 %v1136, %v1144
      %v1153 = vsub.f32 %v1137, %v1145
      %v1154 = vsub.f32 %v1138, %v1146
      %v1155 = vsub.f32 %v1139, %v1147
      %v1156 = vsub.f32 %v1140, %v1148
      %v1157 = vadd.f32 %v1149, 1e-05
      %v1158 = vadd.f32 %v1150, 1e-05
      %v1159 = vadd.f32 %v1151, 1e-05
      %v1160 = vadd.f32 %v1152, 1e-05
      %v1161 = vadd.f32 %v1153, 1e-05
      %v1162 = vadd.f32 %v1154, 1e-05
      %v1163 = vadd.f32 %v1155, 1e-05
      %v1164 = vadd.f32 %v1156, 1e-05
      %v1165 = vrsqrt.pop %v1157
      %v1166 = vrsqrt.pop %v1158
      %v1167 = vrsqrt.pop %v1159
      %v1168 = vrsqrt.pop %v1160
      %v1169 = vrsqrt.pop %v1161
      %v1170 = vrsqrt.pop %v1162
      %v1171 = vrsqrt.pop %v1163
      %v1172 = vrsqrt.pop %v1164
      %v1173 = vld [vmem:[%s3 + $0x1] sm:$0x1]
      %v1174 = vld [vmem:[%s3 + $0x2] sm:$0x1]
      %v1175 = vsub.f32 %v1055, %v1125
      %v1176 = vsub.f32 %v1058, %v1126
      %v1177 = vsub.f32 %v1063, %v1127
      %v1178 = vsub.f32 %v1066, %v1128
      %v1179 = vsub.f32 %v1071, %v1129
      %v1180 = vsub.f32 %v1074, %v1130
      %v1181 = vsub.f32 %v1079, %v1131
      %v1182 = vsub.f32 %v1082, %v1132
      %v1183 = vlaneseq
      %v1184 = vshrl.u32 %v1183, 7
      %v1185 = vsub.s32 0, %v1184
      %v1186 = vrot.slane %v1173, %v1185
      %v1187 = vmul.f32 %v1165, %v1186
      %v1188 = vmul.f32 %v1166, %v1186
      %v1189 = vmul.f32 %v1167, %v1186
      %v1190 = vmul.f32 %v1168, %v1186
      %v1191 = vmul.f32 %v1169, %v1186
      %v1192 = vmul.f32 %v1170, %v1186
      %v1193 = vmul.f32 %v1171, %v1186
      %v1194 = vmul.f32 %v1172, %v1186
      %v1195 = vmul.f32 %v1175, %v1187
      %v1196 = vmul.f32 %v1176, %v1188
      %v1197 = vmul.f32 %v1177, %v1189
      %v1198 = vmul.f32 %v1178, %v1190
      %v1199 = vmul.f32 %v1179, %v1191
      %v1200 = vmul.f32 %v1180, %v1192
      %v1201 = vmul.f32 %v1181, %v1193
      %v1202 = vmul.f32 %v1182, %v1194
      %v1203 = vlaneseq
      %v1204 = vshrl.u32 %v1203, 7
      %v1205 = vsub.s32 0, %v1204
      %v1206 = vrot.slane %v1174, %v1205
      %v1207 = vadd.f32 %v1195, %v1206
      %v1208 = vadd.f32 %v1196, %v1206
      %v1209 = vadd.f32 %v1197, %v1206
      %v1210 = vadd.f32 %v1198, %v1206
      %v1211 = vadd.f32 %v1199, %v1206
      %v1212 = vadd.f32 %v1200, %v1206
      %v1213 = vadd.f32 %v1201, %v1206
      %v1214 = vadd.f32 %v1202, %v1206
      %1215 = vst [vmem:[%s311] sm:$0xff] %v1207
      %1216 = vst [vmem:[%s311 + $0x8] sm:$0xff] %v1208
      %1217 = vst [vmem:[%s311 + $0x10] sm:$0xff] %v1209
      %1218 = vst [vmem:[%s311 + $0x18] sm:$0xff] %v1210
      %1219 = vst [vmem:[%s311 + $0x20] sm:$0xff] %v1211
      %1220 = vst [vmem:[%s311 + $0x28] sm:$0xff] %v1212
      %1221 = vst [vmem:[%s311 + $0x30] sm:$0xff] %v1213
      %1222 = vst [vmem:[%s311 + $0x38] sm:$0xff] %v1214
      %s1223 = smul.u32 8, %s20
      %p1224 = scmp.lt.s32.totalorder %s19, 1
      %s1225 = scalar_select %p1224, %s19, 1
      %p1226 = scmp.lt.s32.totalorder %s1223, 15
      %s1227 = scalar_select %p1226, %s1223, 15
      %s1228 = smul.addr %s1225, 16
      %s1229 = sadd.s32 %s1227, %s1228
      %s1230 = smul.addr %s1229, 8
      %s1231 = scalar_lea.vmem %s4, %s1230
      // Predicated region
      $region37: #{_merge_block_impl.1} parent=35 // pred_check
        %p1232 = pneg %p149
      $region38: #{_merge_block_impl.1} parent=35 // pred_check_branch
        %1234 = sbr.rel (%p1232) target = $region40
      $region39: #{_merge_block_impl.1} parent=35 // pred_region
        %s1235 = smul.u32 8, %s20
      $region40: #{_merge_block_impl.1} parent=35 // pred_fallthru
        _
    $region36: #{_merge_block_impl.1} parent=5 // pred_fallthru
      _
    %p1236 = scmp.le.s32.totalorder 2, %s10
    // Predicated region
    $region41: #{_merge_block_impl.1} parent=5 // pred_check
      %p1237 = pneg %p1236
    $region42: #{_merge_block_impl.1} parent=5 // pred_check_branch
      %1239 = sbr.rel (%p1237) target = $region44
    $region43: #{_merge_block_impl.1} parent=5 // pred_region
      %s1240 = ssub.s32 %s10, 2
      // Predicated region
      $region45: #{_merge_block_impl.1} parent=43 // pred_check
        %p1241 = pneg %p155
      $region46: #{_merge_block_impl.1} parent=43 // pred_check_branch
        %1243 = sbr.rel (%p1241) target = $region48
      $region47: #{_merge_block_impl.1} parent=43 // pred_region
        %s1244 = smul.u32 8, %s22
        %p1245 = scmp.lt.s32.totalorder %s21, 1
        %s1246 = scalar_select %p1245, %s21, 1
        %p1247 = scmp.lt.s32.totalorder %s1244, 15
        %s1248 = scalar_select %p1247, %s1244, 15
        %s1249 = smul.addr %s1246, 16
        %s1250 = sadd.s32 %s1248, %s1249
        %s1251 = smul.addr %s1250, 8
        %s1252 = scalar_lea.vmem %s4, %s1251
      $region48: #{_merge_block_impl.1} parent=43 // pred_fallthru
        _
    $region44: #{_merge_block_impl.1} parent=5 // pred_fallthru
      _
  $region6: #{_merge_block_impl.1} parent=0 // loop_footer
    %s14 = sadd.s32 1, %s10
  $region7: #{_merge_block_impl.1} parent=0 // loop_footer_branch
    %9 = sbr.rel target = $region3
  $region8: #{_merge_block_impl.1} parent=0 // loop_exit
    _

</llo_original>
